<compile_context>
chip_gen: v7x
topology: tpu7x:2x2x1
jax: 0.10.0
libtpu: 0.0.40
codegen_flags: <defaults>
</compile_context>

<pallas_src>
import functools

import jax
import jax.numpy as jnp
import numpy as np
from jax.experimental import pallas as pl
from jax.experimental.pallas import tpu as pltpu


def _round_up(n: int, m: int) -> int:
    return ((n + m - 1) // m) * m


def _cdiv(a: int, b: int) -> int:
    return (a + b - 1) // b


# ---------------------------------------------------------------------------
# Fused kernel: shared LayerNorm stats -> per-head (affine + ReLU) -> one dot
# per head written to that head's 128-aligned output column strip.
# ---------------------------------------------------------------------------
def _fused_heads_kernel(x_ref, gamma_ref, beta_ref, w_ref, b_ref, o_ref, *,
                        col_offsets, col_widths):
    x = x_ref[...].astype(jnp.float32)               # (TB, D), no feature padding
    # LayerNorm stats over the real D (eps=1e-5, population variance -> matches
    # nn.LayerNorm).  Exact: there are no padded feature lanes in the array.
    mean = jnp.mean(x, axis=-1, keepdims=True)
    diff = x - mean
    var = jnp.mean(diff * diff, axis=-1, keepdims=True)
    xn = diff * jax.lax.rsqrt(var + jnp.float32(1e-5))   # (TB, D), shared by all heads

    num_heads = gamma_ref.shape[0]
    for h in range(num_heads):                        # static Python loop (small H)
        off = col_offsets[h]
        width = col_widths[h]
        # Per-head affine + ReLU; only this one (TB, D) tile is live at a time.
        y = jnp.maximum(xn * gamma_ref[h:h + 1, :] + beta_ref[h:h + 1, :], 0.0)
        y = y.astype(jnp.bfloat16)                    # bf16 MXU operands, f32 accum
        out_h = jnp.dot(y, w_ref[:, off:off + width],
                        preferred_element_type=jnp.float32)
        out_h = out_h + b_ref[:, off:off + width]
        # Final per-head activation is nn.Identity() -> nothing to do.
        o_ref[:, off:off + width] = out_h.astype(o_ref.dtype)   # 128-aligned, lane-dense


def _pick_batch_tile(batch: int, tb_max: int) -> int:
    """Batch tile: minimal padding waste, >=2 grid steps for medium+ batches."""
    if batch > tb_max:
        n_steps = _cdiv(batch, tb_max)
    elif batch >= 32:
        n_steps = 2           # give v7x's two TensorCores / the pipeline something to split
    else:
        n_steps = 1           # tiny batch: a second step is pure overhead
    tb = _round_up(_cdiv(batch, n_steps), 16)         # 16 -> packed bf16 sublanes for y
    tb = min(tb, _round_up(batch, 8))                 # never exceed (8-aligned) batch
    return tb


def _fused_pallas_forward(x, params, *, tb_max=256):
    # tb_max=256 is safe on v7x's 64 MiB VMEM; v5e/v6e (128 MiB) could use 512.
    gamma, beta, w, b = params["gamma"], params["beta"], params["w"], params["b"]
    num_heads, d = gamma.shape
    _, c_all = w.shape
    batch, d_in = x.shape
    assert d_in == d, (d_in, d)

    tb = _pick_batch_tile(batch, tb_max)
    b_pad = _round_up(batch, tb)
    x_pad = x if b_pad == batch else jnp.pad(x, ((0, b_pad - batch), (0, 0)))

    # Explicit VMEM budget: weights (x2 buffers, conservatively), LN params,
    # double-buffered x / out tiles, plus slack for temporaries.
    vmem_bytes = (
        2 * w.size * 2                                   # bf16 weight slab
        + 2 * (gamma.size + beta.size + b.size) * 4      # gamma, beta, bias
        + 2 * tb * d * 4                                 # x tile (double-buffered)
        + 2 * tb * c_all * 4                             # out tile (double-buffered)
        + (4 << 20)                                      # slack
    )
    vmem_bytes = int(min(max(vmem_bytes, 16 << 20), 96 << 20))

    kernel = functools.partial(
        _fused_heads_kernel,
        col_offsets=params["col_offsets"],
        col_widths=params["col_widths"],
    )

    out = pl.pallas_call(
        kernel,
        out_shape=jax.ShapeDtypeStruct((b_pad, c_all), x.dtype),
        grid_spec=pltpu.PrefetchScalarGridSpec(
            num_scalar_prefetch=0,
            grid=(b_pad // tb,),
            in_specs=[
                pl.BlockSpec((tb, d), lambda i: (i, 0)),           # x tile
                pl.BlockSpec((num_heads, d), lambda i: (0, 0)),    # stacked gamma
                pl.BlockSpec((num_heads, d), lambda i: (0, 0)),    # stacked beta
                pl.BlockSpec((d, c_all), lambda i: (0, 0)),        # dense per-head W slab
                pl.BlockSpec((1, c_all), lambda i: (0, 0)),        # packed bias
            ],
            out_specs=pl.BlockSpec((tb, c_all), lambda i: (i, 0)),
        ),
        compiler_params=pltpu.CompilerParams(
            dimension_semantics=("parallel",),
            vmem_limit_bytes=vmem_bytes,
        ),
    )(x_pad, gamma, beta, w, b)
    return out


def multitask_classifier_forward(x, params):
    """Equivalent of MultitaskClassifier.forward: returns one output per task."""
    out_pad = _fused_pallas_forward(x, params)
    batch = x.shape[0]
    outs = []
    for c, off in zip(params["tasks"], params["col_offsets"]):
        outs.append(out_pad[:batch, off:off + c])
    return outs


# ---------------------------------------------------------------------------
# Parameter construction (mirrors the PyTorch module's per-head shapes, then
# packs them into the dense per-head column-strip layout the kernel consumes).
# ---------------------------------------------------------------------------
def init_multitask_params(key, latent_dim, tasks):
    d = latent_dim
    num_heads = len(tasks)
    widths = [max(128, _round_up(c, 128)) for c in tasks]     # per-head 128-aligned strip
    offsets = [0] * num_heads
    for h in range(1, num_heads):
        offsets[h] = offsets[h - 1] + widths[h - 1]
    c_all = sum(widths)

    gamma = np.zeros((num_heads, d), np.float32)
    beta = np.zeros((num_heads, d), np.float32)
    w_slab = np.zeros((d, c_all), np.float32)                 # dense (D, C_all) slab
    b_slab = np.zeros((1, c_all), np.float32)

    heads = []   # raw per-head params, kept only for the pure-JAX reference
    bound = 1.0 / (d ** 0.5)
    for h, c in enumerate(tasks):
        key, kw, kb = jax.random.split(key, 3)
        weight = jax.random.uniform(kw, (c, d), minval=-bound, maxval=bound,
                                    dtype=jnp.float32)        # nn.Linear-style init
        bias = jax.random.uniform(kb, (c,), minval=-bound, maxval=bound,
                                  dtype=jnp.float32)
        g = jnp.ones((d,), jnp.float32)                       # LayerNorm defaults
        be = jnp.zeros((d,), jnp.float32)
        w_bf16 = weight.astype(jnp.bfloat16)                  # bf16 master weights

        gamma[h, :] = np.asarray(g)
        beta[h, :] = np.asarray(be)
        w_slab[:, offsets[h]:offsets[h] + c] = np.asarray(
            w_bf16.astype(jnp.float32)).T                     # (D, C) block, padded cols = 0
        b_slab[0, offsets[h]:offsets[h] + c] = np.asarray(bias)

        heads.append({"gamma": g, "beta": be, "w_bf16": w_bf16, "bias": bias})

    return {
        "tasks": tuple(tasks),
        "col_offsets": tuple(int(o) for o in offsets),
        "col_widths": tuple(int(w) for w in widths),
        "latent_dim": d,
        "gamma": jnp.asarray(gamma),
        "beta": jnp.asarray(beta),
        "w": jnp.asarray(w_slab).astype(jnp.bfloat16),        # lossless (built from bf16)
        "b": jnp.asarray(b_slab),
        "heads": heads,
    }


# ---------------------------------------------------------------------------
# Pure-JAX reference (PyTorch semantics, f32 math, same stored bf16 weights).
# ---------------------------------------------------------------------------
def _reference_forward(x, params):
    xf = x.astype(jnp.float32)
    mean = jnp.mean(xf, axis=-1, keepdims=True)
    var = jnp.mean(jnp.square(xf - mean), axis=-1, keepdims=True)
    xn = (xf - mean) * jax.lax.rsqrt(var + 1e-5)
    outs = []
    for head in params["heads"]:
        y = jnp.maximum(xn * head["gamma"] + head["beta"], 0.0)
        w = head["w_bf16"].astype(jnp.float32)
        outs.append(y @ w.T + head["bias"])
    return outs


if __name__ == "__main__":
    key = jax.random.PRNGKey(0)
    batch = 8
    latent_dim = 32
    tasks = [4, 7, 10]                       # three heads, different class counts

    key, kx = jax.random.split(key)
    x = jax.random.normal(kx, (batch, latent_dim), dtype=jnp.float32)

    params = init_multitask_params(key, latent_dim, tasks)

    outs = multitask_classifier_forward(x, params)
    outs = [jax.block_until_ready(o) for o in outs]

    refs = _reference_forward(x, params)
    for o, r, c in zip(outs, refs, tasks):
        assert o.shape == (batch, c), (o.shape, (batch, c))
        # Tolerance covers the in-kernel bf16 cast of the activations before the
        # MXU matmul (f32 accumulation); LN stats and bias add are exact f32.
        assert jnp.allclose(o, r, atol=2e-2, rtol=2e-2), "mismatch vs reference"

    print("KERNEL_OK")
</pallas_src>

<mosaic_0001>
module attributes {stable_mosaic.version = 11 : i64} {
  func.func @_fused_heads_kernel(%arg0: i32, %arg1: memref<8x32xf32, #tpu.memory_space<vmem>>, %arg2: memref<3x32xf32, #tpu.memory_space<vmem>>, %arg3: memref<3x32xf32, #tpu.memory_space<vmem>>, %arg4: memref<32x384xbf16, #tpu.memory_space<vmem>>, %arg5: memref<1x384xf32, #tpu.memory_space<vmem>>, %arg6: memref<8x384xf32, #tpu.memory_space<vmem>>) attributes {dimension_semantics = [#tpu.dimension_semantics<parallel>], iteration_bounds = array<i64: 1>, scalar_prefetch = 0 : i64, scratch_operands = 0 : i64, tpu.core_type = #tpu.core_type<tc>, window_params = [{transform_indices = @transform_0, window_bounds = array<i64: 8, 32>}, {pipeline_mode = #tpu.pipeline_mode<synchronous>, transform_indices = @transform_1, window_bounds = array<i64: 3, 32>}, {pipeline_mode = #tpu.pipeline_mode<synchronous>, transform_indices = @transform_2, window_bounds = array<i64: 3, 32>}, {pipeline_mode = #tpu.pipeline_mode<synchronous>, transform_indices = @transform_3, window_bounds = array<i64: 32, 384>}, {pipeline_mode = #tpu.pipeline_mode<synchronous>, transform_indices = @transform_4, window_bounds = array<i64: 1, 384>}, {transform_indices = @transform_5, window_bounds = array<i64: 8, 384>}]} {
    %c0 = arith.constant 0 : index
    %c0_0 = arith.constant 0 : index
    %0 = vector.load %arg1[%c0, %c0_0] : memref<8x32xf32, #tpu.memory_space<vmem>>, vector<8x32xf32>
    %cst = arith.constant dense<0.000000e+00> : vector<8xf32>
    %1 = vector.multi_reduction <add>, %0, %cst [1] : vector<8x32xf32> to vector<8xf32>
    %2 = vector.shape_cast %1 : vector<8xf32> to vector<8x1xf32>
    %cst_1 = arith.constant 3.200000e+01 : f32
    %3 = vector.broadcast %cst_1 : f32 to vector<8x1xf32>
    %4 = arith.divf %2, %3 : vector<8x1xf32>
    %5 = vector.broadcast %4 : vector<8x1xf32> to vector<8x32xf32>
    %6 = arith.subf %0, %5 : vector<8x32xf32>
    %7 = arith.mulf %6, %6 : vector<8x32xf32>
    %cst_2 = arith.constant dense<0.000000e+00> : vector<8xf32>
    %8 = vector.multi_reduction <add>, %7, %cst_2 [1] : vector<8x32xf32> to vector<8xf32>
    %9 = vector.shape_cast %8 : vector<8xf32> to vector<8x1xf32>
    %cst_3 = arith.constant 3.200000e+01 : f32
    %10 = vector.broadcast %cst_3 : f32 to vector<8x1xf32>
    %11 = arith.divf %9, %10 : vector<8x1xf32>
    %cst_4 = arith.constant 9.99999974E-6 : f32
    %12 = vector.broadcast %cst_4 : f32 to vector<8x1xf32>
    %13 = arith.addf %11, %12 : vector<8x1xf32>
    %14 = math.rsqrt %13 : vector<8x1xf32>
    %15 = vector.broadcast %14 : vector<8x1xf32> to vector<8x32xf32>
    %16 = arith.mulf %6, %15 : vector<8x32xf32>
    %c0_5 = arith.constant 0 : index
    %c0_6 = arith.constant 0 : index
    %17 = vector.load %arg2[%c0_5, %c0_6] : memref<3x32xf32, #tpu.memory_space<vmem>>, vector<1x32xf32>
    %18 = vector.broadcast %17 : vector<1x32xf32> to vector<8x32xf32>
    %19 = arith.mulf %16, %18 : vector<8x32xf32>
    %c0_7 = arith.constant 0 : index
    %c0_8 = arith.constant 0 : index
    %20 = vector.load %arg3[%c0_7, %c0_8] : memref<3x32xf32, #tpu.memory_space<vmem>>, vector<1x32xf32>
    %21 = vector.broadcast %20 : vector<1x32xf32> to vector<8x32xf32>
    %22 = arith.addf %19, %21 : vector<8x32xf32>
    %cst_9 = arith.constant 0.000000e+00 : f32
    %23 = vector.broadcast %cst_9 : f32 to vector<8x32xf32>
    %24 = arith.maximumf %22, %23 : vector<8x32xf32>
    %25 = arith.truncf %24 : vector<8x32xf32> to vector<8x32xbf16>
    %c0_10 = arith.constant 0 : index
    %c0_11 = arith.constant 0 : index
    %26 = vector.load %arg4[%c0_10, %c0_11] : memref<32x384xbf16, #tpu.memory_space<vmem>>, vector<32x128xbf16>
    %cst_12 = arith.constant dense<0.000000e+00> : vector<8x128xf32>
    %27 = tpu.matmul %25, %26, %cst_12 {dimension_numbers = #tpu.dot_dimension_numbers<[1], [0], [0], [1], [0, 0, 1, 1], [], []>} : vector<8x32xbf16>, vector<32x128xbf16>, vector<8x128xf32> -> vector<8x128xf32>
    %c0_13 = arith.constant 0 : index
    %c0_14 = arith.constant 0 : index
    %28 = vector.load %arg5[%c0_13, %c0_14] : memref<1x384xf32, #tpu.memory_space<vmem>>, vector<1x128xf32>
    %29 = vector.broadcast %28 : vector<1x128xf32> to vector<8x128xf32>
    %30 = arith.addf %27, %29 : vector<8x128xf32>
    %c0_15 = arith.constant 0 : index
    %c0_16 = arith.constant 0 : index
    %31 = vector.load %arg6[%c0_15, %c0_16] : memref<8x384xf32, #tpu.memory_space<vmem>>, vector<8x128xf32>
    tpu.vector_store %arg6[%c0_15, %c0_16], %30 {strides = array<i32>} : memref<8x384xf32, #tpu.memory_space<vmem>>, vector<8x128xf32>,
    %c1 = arith.constant 1 : index
    %c0_17 = arith.constant 0 : index
    %32 = vector.load %arg2[%c1, %c0_17] : memref<3x32xf32, #tpu.memory_space<vmem>>, vector<1x32xf32>
    %33 = vector.broadcast %32 : vector<1x32xf32> to vector<8x32xf32>
    %34 = arith.mulf %16, %33 : vector<8x32xf32>
    %c1_18 = arith.constant 1 : index
    %c0_19 = arith.constant 0 : index
    %35 = vector.load %arg3[%c1_18, %c0_19] : memref<3x32xf32, #tpu.memory_space<vmem>>, vector<1x32xf32>
    %36 = vector.broadcast %35 : vector<1x32xf32> to vector<8x32xf32>
    %37 = arith.addf %34, %36 : vector<8x32xf32>
    %cst_20 = arith.constant 0.000000e+00 : f32
    %38 = vector.broadcast %cst_20 : f32 to vector<8x32xf32>
    %39 = arith.maximumf %37, %38 : vector<8x32xf32>
    %40 = arith.truncf %39 : vector<8x32xf32> to vector<8x32xbf16>
    %c0_21 = arith.constant 0 : index
    %c128 = arith.constant 128 : index
    %41 = vector.load %arg4[%c0_21, %c128] : memref<32x384xbf16, #tpu.memory_space<vmem>>, vector<32x128xbf16>
    %cst_22 = arith.constant dense<0.000000e+00> : vector<8x128xf32>
    %42 = tpu.matmul %40, %41, %cst_22 {dimension_numbers = #tpu.dot_dimension_numbers<[1], [0], [0], [1], [0, 0, 1, 1], [], []>} : vector<8x32xbf16>, vector<32x128xbf16>, vector<8x128xf32> -> vector<8x128xf32>
    %c0_23 = arith.constant 0 : index
    %c128_24 = arith.constant 128 : index
    %43 = vector.load %arg5[%c0_23, %c128_24] : memref<1x384xf32, #tpu.memory_space<vmem>>, vector<1x128xf32>
    %44 = vector.broadcast %43 : vector<1x128xf32> to vector<8x128xf32>
    %45 = arith.addf %42, %44 : vector<8x128xf32>
    %c0_25 = arith.constant 0 : index
    %c128_26 = arith.constant 128 : index
    %46 = vector.load %arg6[%c0_25, %c128_26] : memref<8x384xf32, #tpu.memory_space<vmem>>, vector<8x128xf32>
    tpu.vector_store %arg6[%c0_25, %c128_26], %45 {strides = array<i32>} : memref<8x384xf32, #tpu.memory_space<vmem>>, vector<8x128xf32>,
    %c2 = arith.constant 2 : index
    %c0_27 = arith.constant 0 : index
    %47 = vector.load %arg2[%c2, %c0_27] : memref<3x32xf32, #tpu.memory_space<vmem>>, vector<1x32xf32>
    %48 = vector.broadcast %47 : vector<1x32xf32> to vector<8x32xf32>
    %49 = arith.mulf %16, %48 : vector<8x32xf32>
    %c2_28 = arith.constant 2 : index
    %c0_29 = arith.constant 0 : index
    %50 = vector.load %arg3[%c2_28, %c0_29] : memref<3x32xf32, #tpu.memory_space<vmem>>, vector<1x32xf32>
    %51 = vector.broadcast %50 : vector<1x32xf32> to vector<8x32xf32>
    %52 = arith.addf %49, %51 : vector<8x32xf32>
    %cst_30 = arith.constant 0.000000e+00 : f32
    %53 = vector.broadcast %cst_30 : f32 to vector<8x32xf32>
    %54 = arith.maximumf %52, %53 : vector<8x32xf32>
    %55 = arith.truncf %54 : vector<8x32xf32> to vector<8x32xbf16>
    %c0_31 = arith.constant 0 : index
    %c256 = arith.constant 256 : index
    %56 = vector.load %arg4[%c0_31, %c256] : memref<32x384xbf16, #tpu.memory_space<vmem>>, vector<32x128xbf16>
    %cst_32 = arith.constant dense<0.000000e+00> : vector<8x128xf32>
    %57 = tpu.matmul %55, %56, %cst_32 {dimension_numbers = #tpu.dot_dimension_numbers<[1], [0], [0], [1], [0, 0, 1, 1], [], []>} : vector<8x32xbf16>, vector<32x128xbf16>, vector<8x128xf32> -> vector<8x128xf32>
    %c0_33 = arith.constant 0 : index
    %c256_34 = arith.constant 256 : index
    %58 = vector.load %arg5[%c0_33, %c256_34] : memref<1x384xf32, #tpu.memory_space<vmem>>, vector<1x128xf32>
    %59 = vector.broadcast %58 : vector<1x128xf32> to vector<8x128xf32>
    %60 = arith.addf %57, %59 : vector<8x128xf32>
    %c0_35 = arith.constant 0 : index
    %c256_36 = arith.constant 256 : index
    %61 = vector.load %arg6[%c0_35, %c256_36] : memref<8x384xf32, #tpu.memory_space<vmem>>, vector<8x128xf32>
    tpu.vector_store %arg6[%c0_35, %c256_36], %60 {strides = array<i32>} : memref<8x384xf32, #tpu.memory_space<vmem>>, vector<8x128xf32>,
    return
  }
  func.func @transform_0(%arg0: i32) -> (i32, i32) {
    %c0_i32 = arith.constant 0 : i32
    %c0_i32_0 = arith.constant 0 : i32
    return %arg0, %c0_i32 : i32, i32
  }
  func.func @transform_1(%arg0: i32) -> (i32, i32) {
    %c0_i32 = arith.constant 0 : i32
    %c0_i32_0 = arith.constant 0 : i32
    %c0_i32_1 = arith.constant 0 : i32
    return %c0_i32, %c0_i32_0 : i32, i32
  }
  func.func @transform_2(%arg0: i32) -> (i32, i32) {
    %c0_i32 = arith.constant 0 : i32
    %c0_i32_0 = arith.constant 0 : i32
    %c0_i32_1 = arith.constant 0 : i32
    return %c0_i32, %c0_i32_0 : i32, i32
  }
  func.func @transform_3(%arg0: i32) -> (i32, i32) {
    %c0_i32 = arith.constant 0 : i32
    %c0_i32_0 = arith.constant 0 : i32
    %c0_i32_1 = arith.constant 0 : i32
    return %c0_i32, %c0_i32_0 : i32, i32
  }
  func.func @transform_4(%arg0: i32) -> (i32, i32) {
    %c0_i32 = arith.constant 0 : i32
    %c0_i32_0 = arith.constant 0 : i32
    %c0_i32_1 = arith.constant 0 : i32
    return %c0_i32, %c0_i32_0 : i32, i32
  }
  func.func @transform_5(%arg0: i32) -> (i32, i32) {
    %c0_i32 = arith.constant 0 : i32
    %c0_i32_0 = arith.constant 0 : i32
    return %arg0, %c0_i32 : i32, i32
  }
}

</mosaic_0001>

<llo_original>
// kernel: tpu_custom_call.1
$region0: #{tpu_custom_call.1}
  #allocation0 [shape = 'u32[]', space=smem, size = 0x4, offset = 0x4, fixed_abs, tag = 'smem constant byte address 0x4 - core index']
  #allocation1 [shape = 'u32[144,128]{1,0:T(1,128)}', space=vmem, size = 0x12000, scoped, tag = 'internal scratch']
  %s0 = inlined_call_operand.hbm [shape: f32[8,32], index: 0, kind: input, shape index: {}]
  %s1 = inlined_call_operand.hbm [shape: f32[3,32], index: 1, kind: input, shape index: {}]
  %s2 = inlined_call_operand.vmem [shape: f32[3,32], index: 2, kind: input, shape index: {}]
  %s3 = inlined_call_operand.hbm [shape: bf16[32,384], index: 3, kind: input, shape index: {}]
  %s4 = inlined_call_operand.vmem [shape: f32[1,384], index: 4, kind: input, shape index: {}]
  %s5 = inlined_call_operand.hbm [shape: f32[8,384], index: 5, kind: output, shape index: {}]
  %s6 = sld [smem:[#allocation0]]
  $region42: #{tpu_custom_call.1} parent=0
    _
  %s8 = ssub.s32 1, %s6
  %s9 = scalar_select 0, %s8, %s6
  $region1: #{tpu_custom_call.1} parent=0
    #allocation2 [shape = 'u8[4096]{0}', space=vmem, size = 0x1000, scoped, tag = 'input window, operand 0, single buffered']
    #allocation3 [shape = 's32[1]{0}', space=sflag, size = 0x4, scoped, tag = 'scoped memory for tpu_custom_call.1']
    #allocation4 [shape = 's32[1]{0}', space=sflag, size = 0x4, scoped, tag = 'scoped memory for tpu_custom_call.1']
    #allocation5 [shape = 'u8[2048]{0}', space=vmem, size = 0x800, scoped, tag = 'input window, operand 1, single buffered']
    #allocation6 [shape = 's32[1]{0}', space=sflag, size = 0x4, scoped, tag = 'scoped memory for tpu_custom_call.1']
    #allocation7 [shape = 'u8[24576]{0}', space=vmem, size = 0x6000, scoped, tag = 'input window, operand 3, single buffered']
    #allocation8 [shape = 'u8[12288]{0}', space=vmem, size = 0x3000, scoped, tag = 'output window, operand 0, single buffered']
    %10 = vsyncpa [#allocation3], 0
    %11 = vsyncpa [#allocation6], 0
    %12 = vsyncpa [#allocation4], 0
    // Predicated region
    $region2: #{tpu_custom_call.1} parent=1 // pred_check
      _
    $region3: #{tpu_custom_call.1} parent=1 // pred_check_branch
      %14 = sbr.rel (0) target = $region5
    $region4: #{tpu_custom_call.1} parent=1 // pred_region
      %s16 = ssub.s32 128, 128
      %17 = vsyncadd [#allocation3], %s16
      %s19 = sshll.u32 [#allocation2], 4
      %s20 = int_to_ptr.vmem [resolvable:$true] %s19
      %22 = dma.hbm_to_vmem [thread:$0]  %s0, 128, %s20, [#allocation3]
    $region5: #{tpu_custom_call.1} parent=1 // pred_fallthru
      _
    // Predicated region
    $region6: #{tpu_custom_call.1} parent=1 // pred_check
      _
    $region7: #{tpu_custom_call.1} parent=1 // pred_check_branch
      %24 = sbr.rel (0) target = $region9
    $region8: #{tpu_custom_call.1} parent=1 // pred_region
      %s26 = ssub.s32 64, 64
      %27 = vsyncadd [#allocation6], %s26
      %s29 = sshll.u32 [#allocation5], 4
      %s30 = int_to_ptr.vmem [resolvable:$true] %s29
      %32 = dma.hbm_to_vmem [thread:$0]  %s1, 64, %s30, [#allocation6]
    $region9: #{tpu_custom_call.1} parent=1 // pred_fallthru
      _
    // Predicated region
    $region10: #{tpu_custom_call.1} parent=1 // pred_check
      _
    $region11: #{tpu_custom_call.1} parent=1 // pred_check_branch
      %34 = sbr.rel (0) target = $region13
    $region12: #{tpu_custom_call.1} parent=1 // pred_region
      _
    $region13: #{tpu_custom_call.1} parent=1 // pred_fallthru
      _
    // Predicated region
    $region14: #{tpu_custom_call.1} parent=1 // pred_check
      _
    $region15: #{tpu_custom_call.1} parent=1 // pred_check_branch
      %36 = sbr.rel (0) target = $region17
    $region16: #{tpu_custom_call.1} parent=1 // pred_region
      %s38 = ssub.s32 768, 768
      %39 = vsyncadd [#allocation6], %s38
      %s40 = sshll.u32 [#allocation7], 4
      %s41 = int_to_ptr.vmem [resolvable:$true] %s40
      %46 = dma.hbm_to_vmem [thread:$0]  %s3, 768, %s41, [#allocation6], 192, 192, 12
    $region17: #{tpu_custom_call.1} parent=1 // pred_fallthru
      _
    // Predicated region
    $region18: #{tpu_custom_call.1} parent=1 // pred_check
      _
    $region19: #{tpu_custom_call.1} parent=1 // pred_check_branch
      %48 = sbr.rel (0) target = $region21
    $region20: #{tpu_custom_call.1} parent=1 // pred_region
      _
    $region21: #{tpu_custom_call.1} parent=1 // pred_fallthru
      _
    // Predicated region
    $region22: #{tpu_custom_call.1} parent=1 // pred_check
      _
    $region23: #{tpu_custom_call.1} parent=1 // pred_check_branch
      %50 = sbr.rel (0) target = $region25
    $region24: #{tpu_custom_call.1} parent=1 // pred_region
      %51 = dma.done [#allocation3], 128
    $region25: #{tpu_custom_call.1} parent=1 // pred_fallthru
      _
    // Predicated region
    $region26: #{tpu_custom_call.1} parent=1 // pred_check
      _
    $region27: #{tpu_custom_call.1} parent=1 // pred_check_branch
      %53 = sbr.rel (0) target = $region29
    $region28: #{tpu_custom_call.1} parent=1 // pred_region
      %54 = dma.done [#allocation6], 64
    $region29: #{tpu_custom_call.1} parent=1 // pred_fallthru
      _
    // Predicated region
    $region30: #{tpu_custom_call.1} parent=1 // pred_check
      _
    $region31: #{tpu_custom_call.1} parent=1 // pred_check_branch
      %56 = sbr.rel (0) target = $region33
    $region32: #{tpu_custom_call.1} parent=1 // pred_region
      %57 = dma.done [#allocation6], 768
    $region33: #{tpu_custom_call.1} parent=1 // pred_fallthru
      _
    %v59 = vld [vmem:[#allocation2] sm:$0xff]
    %vm60 = vcmask 261120
    %v61 = vsel %vm60, %v59, 0.0
    %62 = vadd.xlane.f32.xlu0 %v61
    %v63 = vpop.xlane.xlu0 %62
    %v64 = vrcp.pop 32.0
    %v65 = vmul.f32 %v63, %v64
    %v66 = vsub.f32 %v59, %v65
    %v67 = vmul.f32 %v66, %v66
    %v68 = vsel %vm60, %v67, 0.0
    %69 = vadd.xlane.f32.xlu0 %v68
    %v70 = vpop.xlane.xlu0 %69
    %v71 = vmul.f32 %v70, %v64
    %v72 = vadd.f32 %v71, 1e-05
    %v73 = vrsqrt.pop %v72
    %v74 = vmul.f32 %v66, %v73
    %v75 = vld [vmem:[#allocation5] sm:$0x1]
    %v76 = vlaneseq
    %v77 = vshrl.u32 %v76, 7
    %v78 = vsub.s32 0, %v77
    %v79 = vrot.slane %v75, %v78
    %v80 = vmul.f32 %v74, %v79
    %v81 = vld [vmem:[%s2] sm:$0x1]
    %v82 = vlaneseq
    %v83 = vshrl.u32 %v82, 7
    %v84 = vsub.s32 0, %v83
    %v85 = vrot.slane %v81, %v84
    %v86 = vadd.f32 %v80, %v85
    %v87 = vmax.f32 %v86, 0.0
    %v88 = vpack.c.bf16 %v87, %v87
    %v89 = vld [vmem:[#allocation7] sm:$0xf]
    %v90 = vld [vmem:[#allocation7 + $0xc] sm:$0xf]
    %v91 = vld [vmem:[#allocation7 + $0x18] sm:$0xf]
    %v92 = vld [vmem:[#allocation7 + $0x24] sm:$0xf]
    %v93 = vld [vmem:[%s4] sm:$0x1]
    %v95 = vlaneseq
    %v96 = vshrl.u32 %v95, 7
    %v97 = vsub.s32 0, %v96
    %v98 = vrot.slane %v93, %v97
    %v104 = vunpack.c.l.b16 %v89
    %v105 = vunpack.c.l.b16 %v90
    %v106 = vunpack.c.l.b16 %v91
    %v107 = vunpack.c.l.b16 %v92
    %v108 = vpack.c.b16 %v105, %v104
    %v109 = vpack.c.b16 %v107, %v106
    %v113 = vsel %vm60, %v88, 0
    %115 = vmatprep.subr.bf16.mxu0 0
    %116 = vmatpush1.bf16.msra.mxu0 %v108
    %117 = vmatprep.subr.bf16.mxu0 0
    %118 = vmatpush1.bf16.msra.mxu0 %v109
    %119 = vmatprep.subr.bf16.mxu0 0
    %120 = vmatpush1.bf16.msra.mxu0 0
    %121 = vmatprep.subr.bf16.mxu0 0
    %122 = vmatpush1.bf16.msra.mxu0 0
    %123 = vmatprep.subr.bf16.mxu0 0
    %124 = vmatpush1.bf16.msra.mxu0 0
    %125 = vmatprep.subr.bf16.mxu0 0
    %126 = vmatpush1.bf16.msra.mxu0 0
    %127 = vmatprep.subr.bf16.mxu0 0
    %128 = vmatpush1.bf16.msra.mxu0 0
    %129 = vmatprep.subr.bf16.mxu0 0
    %130 = vmatpush1.bf16.msra.mxu0 0
    %131 = vmatprep.subr.bf16.mxu0 0
    %132 = vmatpush1.bf16.msra.mxu0 0
    %133 = vmatprep.subr.bf16.mxu0 0
    %134 = vmatpush1.bf16.msra.mxu0 0
    %135 = vmatprep.subr.bf16.mxu0 0
    %136 = vmatpush1.bf16.msra.mxu0 0
    %137 = vmatprep.subr.bf16.mxu0 0
    %138 = vmatpush1.bf16.msra.mxu0 0
    %139 = vmatprep.subr.bf16.mxu0 0
    %140 = vmatpush1.bf16.msra.mxu0 0
    %141 = vmatprep.subr.bf16.mxu0 0
    %142 = vmatpush1.bf16.msra.mxu0 0
    %143 = vmatprep.subr.bf16.mxu0 0
    %144 = vmatpush1.bf16.msra.mxu0 0
    %145 = vmatprep.subr.bf16.mxu0 0
    %146 = vmatpush1.bf16.msra.mxu0 0
    %147 = vmatprep.mubr.bf16.mxu0 0
    %148 = vmatmul.mubr.bf16.gmra.mrb[0].mxu0 %v113
    %v149 = vpop.f32.mrb[0].mxu0
    %v150 = vadd.f32 %v98, %v149
    %v151 = vpop.f32.mrb[0].mxu0
    %v152 = vpop.f32.mrb[0].mxu0
    %v153 = vpop.f32.mrb[0].mxu0
    %154 = vdwg.mxu0
    %155 = vst [vmem:[#allocation8] sm:$0xff] %v150
    %v156 = vld [vmem:[#allocation5 + $0x1] sm:$0x1]
    %v157 = vlaneseq
    %v158 = vshrl.u32 %v157, 7
    %v159 = vsub.s32 0, %v158
    %v160 = vrot.slane %v156, %v159
    %v161 = vmul.f32 %v74, %v160
    %v162 = vld [vmem:[%s2 + $0x1] sm:$0x1]
    %v163 = vlaneseq
    %v164 = vshrl.u32 %v163, 7
    %v165 = vsub.s32 0, %v164
    %v166 = vrot.slane %v162, %v165
    %v167 = vadd.f32 %v161, %v166
    %v168 = vmax.f32 %v167, 0.0
    %v169 = vpack.c.bf16 %v168, %v168
    %v170 = vld [vmem:[#allocation7 + $0x4] sm:$0xf]
    %v171 = vld [vmem:[#allocation7 + $0x10] sm:$0xf]
    %v172 = vld [vmem:[#allocation7 + $0x1c] sm:$0xf]
    %v173 = vld [vmem:[#allocation7 + $0x28] sm:$0xf]
    %v174 = vld [vmem:[%s4 + $0x1] sm:$0x1]
    %v176 = vlaneseq
    %v177 = vshrl.u32 %v176, 7
    %v178 = vsub.s32 0, %v177
    %v179 = vrot.slane %v174, %v178
    %v185 = vunpack.c.l.b16 %v170
    %v186 = vunpack.c.l.b16 %v171
    %v187 = vunpack.c.l.b16 %v172
    %v188 = vunpack.c.l.b16 %v173
    %v189 = vpack.c.b16 %v186, %v185
    %v190 = vpack.c.b16 %v188, %v187
    %v194 = vsel %vm60, %v169, 0
    %196 = vmatprep.subr.bf16.mxu0 0
    %197 = vmatpush1.bf16.msra.mxu0 %v189
    %198 = vmatprep.subr.bf16.mxu0 0
    %199 = vmatpush1.bf16.msra.mxu0 %v190
    %200 = vmatprep.subr.bf16.mxu0 0
    %201 = vmatpush1.bf16.msra.mxu0 0
    %202 = vmatprep.subr.bf16.mxu0 0
    %203 = vmatpush1.bf16.msra.mxu0 0
    %204 = vmatprep.subr.bf16.mxu0 0
    %205 = vmatpush1.bf16.msra.mxu0 0
    %206 = vmatprep.subr.bf16.mxu0 0
    %207 = vmatpush1.bf16.msra.mxu0 0
    %208 = vmatprep.subr.bf16.mxu0 0
    %209 = vmatpush1.bf16.msra.mxu0 0
    %210 = vmatprep.subr.bf16.mxu0 0
    %211 = vmatpush1.bf16.msra.mxu0 0
    %212 = vmatprep.subr.bf16.mxu0 0
    %213 = vmatpush1.bf16.msra.mxu0 0
    %214 = vmatprep.subr.bf16.mxu0 0
    %215 = vmatpush1.bf16.msra.mxu0 0
    %216 = vmatprep.subr.bf16.mxu0 0
    %217 = vmatpush1.bf16.msra.mxu0 0
    %218 = vmatprep.subr.bf16.mxu0 0
    %219 = vmatpush1.bf16.msra.mxu0 0
    %220 = vmatprep.subr.bf16.mxu0 0
    %221 = vmatpush1.bf16.msra.mxu0 0
    %222 = vmatprep.subr.bf16.mxu0 0
    %223 = vmatpush1.bf16.msra.mxu0 0
    %224 = vmatprep.subr.bf16.mxu0 0
    %225 = vmatpush1.bf16.msra.mxu0 0
    %226 = vmatprep.subr.bf16.mxu0 0
    %227 = vmatpush1.bf16.msra.mxu0 0
    %228 = vmatprep.mubr.bf16.mxu0 0
    %229 = vmatmul.mubr.bf16.gmra.mrb[0].mxu0 %v194
    %v230 = vpop.f32.mrb[0].mxu0
    %v231 = vadd.f32 %v179, %v230
    %v232 = vpop.f32.mrb[0].mxu0
    %v233 = vpop.f32.mrb[0].mxu0
    %v234 = vpop.f32.mrb[0].mxu0
    %235 = vdwg.mxu0
    %236 = vst [vmem:[#allocation8 + $0x8] sm:$0xff] %v231
    %v237 = vld [vmem:[#allocation5 + $0x2] sm:$0x1]
    %v238 = vlaneseq
    %v239 = vshrl.u32 %v238, 7
    %v240 = vsub.s32 0, %v239
    %v241 = vrot.slane %v237, %v240
    %v242 = vmul.f32 %v74, %v241
    %v243 = vld [vmem:[%s2 + $0x2] sm:$0x1]
    %v244 = vlaneseq
    %v245 = vshrl.u32 %v244, 7
    %v246 = vsub.s32 0, %v245
    %v247 = vrot.slane %v243, %v246
    %v248 = vadd.f32 %v242, %v247
    %v249 = vmax.f32 %v248, 0.0
    %v250 = vpack.c.bf16 %v249, %v249
    %v251 = vld [vmem:[#allocation7 + $0x8] sm:$0xf]
    %v252 = vld [vmem:[#allocation7 + $0x14] sm:$0xf]
    %v253 = vld [vmem:[#allocation7 + $0x20] sm:$0xf]
    %v254 = vld [vmem:[#allocation7 + $0x2c] sm:$0xf]
    %v255 = vld [vmem:[%s4 + $0x2] sm:$0x1]
    %v257 = vlaneseq
    %v258 = vshrl.u32 %v257, 7
    %v259 = vsub.s32 0, %v258
    %v260 = vrot.slane %v255, %v259
    %v266 = vunpack.c.l.b16 %v251
    %v267 = vunpack.c.l.b16 %v252
    %v268 = vunpack.c.l.b16 %v253
    %v269 = vunpack.c.l.b16 %v254
    %v270 = vpack.c.b16 %v267, %v266
    %v271 = vpack.c.b16 %v269, %v268
    %v275 = vsel %vm60, %v250, 0
    %277 = vmatprep.subr.bf16.mxu0 0
    %278 = vmatpush1.bf16.msra.mxu0 %v270
    %279 = vmatprep.subr.bf16.mxu0 0
    %280 = vmatpush1.bf16.msra.mxu0 %v271
    %281 = vmatprep.subr.bf16.mxu0 0
    %282 = vmatpush1.bf16.msra.mxu0 0
    %283 = vmatprep.subr.bf16.mxu0 0
    %284 = vmatpush1.bf16.msra.mxu0 0
    %285 = vmatprep.subr.bf16.mxu0 0
    %286 = vmatpush1.bf16.msra.mxu0 0
    %287 = vmatprep.subr.bf16.mxu0 0
    %288 = vmatpush1.bf16.msra.mxu0 0
    %289 = vmatprep.subr.bf16.mxu0 0
    %290 = vmatpush1.bf16.msra.mxu0 0
    %291 = vmatprep.subr.bf16.mxu0 0
    %292 = vmatpush1.bf16.msra.mxu0 0
    %293 = vmatprep.subr.bf16.mxu0 0
    %294 = vmatpush1.bf16.msra.mxu0 0
    %295 = vmatprep.subr.bf16.mxu0 0
    %296 = vmatpush1.bf16.msra.mxu0 0
    %297 = vmatprep.subr.bf16.mxu0 0
    %298 = vmatpush1.bf16.msra.mxu0 0
    %299 = vmatprep.subr.bf16.mxu0 0
    %300 = vmatpush1.bf16.msra.mxu0 0
    %301 = vmatprep.subr.bf16.mxu0 0
    %302 = vmatpush1.bf16.msra.mxu0 0
    %303 = vmatprep.subr.bf16.mxu0 0
    %304 = vmatpush1.bf16.msra.mxu0 0
    %305 = vmatprep.subr.bf16.mxu0 0
    %306 = vmatpush1.bf16.msra.mxu0 0
    %307 = vmatprep.subr.bf16.mxu0 0
    %308 = vmatpush1.bf16.msra.mxu0 0
    %309 = vmatprep.mubr.bf16.mxu0 0
    %310 = vmatmul.mubr.bf16.gmra.mrb[0].mxu0 %v275
    %v311 = vpop.f32.mrb[0].mxu0
    %v312 = vadd.f32 %v260, %v311
    %v313 = vpop.f32.mrb[0].mxu0
    %v314 = vpop.f32.mrb[0].mxu0
    %v315 = vpop.f32.mrb[0].mxu0
    %316 = vdwg.mxu0
    %317 = vst [vmem:[#allocation8 + $0x10] sm:$0xff] %v312
    // Predicated region
    $region34: #{tpu_custom_call.1} parent=1 // pred_check
      _
    $region35: #{tpu_custom_call.1} parent=1 // pred_check_branch
      %319 = sbr.rel (0) target = $region37
    $region36: #{tpu_custom_call.1} parent=1 // pred_region
      %s321 = ssub.s32 384, 384
      %322 = vsyncadd [#allocation4], %s321
      %s324 = sshll.u32 [#allocation8], 4
      %s325 = int_to_ptr.vmem [resolvable:$true] %s324
      %327 = dma.vmem_to_hbm [thread:$0]  %s325, 384, %s5, [#allocation4]
    $region37: #{tpu_custom_call.1} parent=1 // pred_fallthru
      _
    // Predicated region
    $region38: #{tpu_custom_call.1} parent=1 // pred_check
      _
    $region39: #{tpu_custom_call.1} parent=1 // pred_check_branch
      %329 = sbr.rel (0) target = $region41
    $region40: #{tpu_custom_call.1} parent=1 // pred_region
      %330 = dma.done [#allocation4], 384
    $region41: #{tpu_custom_call.1} parent=1 // pred_fallthru
      _
    %331 = vsyncpa [#allocation3], 1
    %332 = vsyncpa [#allocation6], 1
    %333 = vsyncpa [#allocation4], 1

</llo_original>
